<compile_context>
chip_gen: v7x
topology: tpu7x:2x2x1
jax: 0.10.0
libtpu: 0.0.40
codegen_flags: <defaults>
</compile_context>

<pallas_src>
import functools
import math

import jax
import jax.numpy as jnp
from jax.experimental import pallas as pl
from jax.experimental.pallas import tpu as pltpu

# Model hyperparameters (small, consistent with a BERT-style FFNN block)
B, S = 2, 8            # batch, sequence
H = 32                 # hidden_dim
M = 128                # middle_dim (4 * hidden)
LN_EPS = 1e-12         # layer_norm_eps
_GELU_C = math.sqrt(2.0 / math.pi)


# ---------------------------------------------------------------------------
# Fused kernel: dense -> GELU(tanh) -> dense -> (+residual) -> LayerNorm
#   x_ref   : (TILE_ROWS, H)   activation row tile
#   w1_ref  : (H, M)           VMEM-resident weight
#   w2_ref  : (M, H)           VMEM-resident weight
#   vec_ref : (2, W)           packed [b1 | pad] / [b2, ln_w, ln_b | pad]
#   o_ref   : (TILE_ROWS, H)
# ---------------------------------------------------------------------------
def ffnn_kernel(x_ref, w1_ref, w2_ref, vec_ref, o_ref, *, h_dim, m_dim):
    x = x_ref[...]                                    # (rows, H)

    # Carve the packed small vectors out of the single operand (static slices).
    vec = vec_ref[...]                                # (2, W)
    b1  = vec[0:1, 0:m_dim]                           # (1, M)
    b2  = vec[1:2, 0:h_dim]                           # (1, H)
    lnw = vec[1:2, h_dim:2 * h_dim]                   # (1, H)
    lnb = vec[1:2, 2 * h_dim:3 * h_dim]               # (1, H)

    # intermediate_dense
    h = jnp.dot(x, w1_ref[...], preferred_element_type=jnp.float32) + b1

    # GELU, tanh approximation (matches nn.GELU(approximate='tanh'))
    g = 0.5 * h * (1.0 + jnp.tanh(_GELU_C * (h + 0.044715 * h * h * h)))

    # last_dense
    d = jnp.dot(g, w2_ref[...], preferred_element_type=jnp.float32) + b2

    # dropout is identity in eval mode; residual add
    y = d + x

    # LayerNorm over the hidden dim (two-pass, centered value reused)
    mean = jnp.mean(y, axis=-1, keepdims=True)
    yc = y - mean
    var = jnp.mean(yc * yc, axis=-1, keepdims=True)
    o_ref[...] = yc * jax.lax.rsqrt(var + LN_EPS) * lnw + lnb


# ---------------------------------------------------------------------------
# Wrapper: one pallas_call, 1-D parallel row grid, weights resident in VMEM
# ---------------------------------------------------------------------------
def ffnn_forward(x, params, *, max_tile_rows=256):
    w1, b1, w2, b2, lnw, lnb = params
    Bb, Ss, Hh = x.shape
    Mm = w1.shape[1]
    rows = Bb * Ss

    # Row-major (free) reshape to a sublane-filled (rows, H) slab.
    x2 = x.reshape(rows, Hh).astype(jnp.float32)

    # Pack the four small vectors into a single (2, W) operand (one DMA).
    W = max(Mm, 3 * Hh)
    W = ((W + 127) // 128) * 128
    row0 = jnp.pad(b1.astype(jnp.float32), (0, W - Mm))
    row1 = jnp.pad(
        jnp.concatenate([b2, lnw, lnb]).astype(jnp.float32), (0, W - 3 * Hh))
    vec = jnp.stack([row0, row1], axis=0)             # (2, W)

    # Row tiling: collapses to a single step at toy sizes, pipelines + shards
    # across TensorCores ("parallel") when rows grow.
    tr = min(max_tile_rows, rows)
    tr = ((tr + 7) // 8) * 8                           # sublane multiple
    rows_p = ((rows + tr - 1) // tr) * tr
    if rows_p != rows:
        x2 = jnp.pad(x2, ((0, rows_p - rows), (0, 0)))
    grid = (rows_p // tr,)

    kernel = functools.partial(ffnn_kernel, h_dim=Hh, m_dim=Mm)

    out = pl.pallas_call(
        kernel,
        out_shape=jax.ShapeDtypeStruct((rows_p, Hh), jnp.float32),
        grid_spec=pltpu.PrefetchScalarGridSpec(
            num_scalar_prefetch=0,
            grid=grid,
            in_specs=[
                pl.BlockSpec((tr, Hh), lambda i: (i, 0)),    # x row tile
                pl.BlockSpec((Hh, Mm), lambda i: (0, 0)),    # w1 (resident)
                pl.BlockSpec((Mm, Hh), lambda i: (0, 0)),    # w2 (resident)
                pl.BlockSpec((2, W), lambda i: (0, 0)),      # packed vectors
            ],
            out_specs=pl.BlockSpec((tr, Hh), lambda i: (i, 0)),
        ),
        compiler_params=pltpu.CompilerParams(
            dimension_semantics=("parallel",)),
    )(x2, w1.astype(jnp.float32), w2.astype(jnp.float32), vec)

    return out[:rows].reshape(Bb, Ss, Hh)


# ---------------------------------------------------------------------------
# Pure-JAX reference (for correctness check of the kernel)
# ---------------------------------------------------------------------------
def ffnn_reference(x, params):
    w1, b1, w2, b2, lnw, lnb = params
    h = x @ w1 + b1
    g = jax.nn.gelu(h, approximate=True)          # tanh approximation
    d = g @ w2 + b2
    y = d + x                                     # dropout identity (eval mode)
    mean = jnp.mean(y, axis=-1, keepdims=True)
    var = jnp.mean(jnp.square(y - mean), axis=-1, keepdims=True)
    return (y - mean) * jax.lax.rsqrt(var + LN_EPS) * lnw + lnb


if __name__ == "__main__":
    key = jax.random.PRNGKey(0)
    keys = jax.random.split(key, 8)

    # nn.Linear-style uniform init: U(-1/sqrt(fan_in), +1/sqrt(fan_in))
    init1 = 1.0 / math.sqrt(H)
    init2 = 1.0 / math.sqrt(M)
    w1 = jax.random.uniform(keys[0], (H, M), jnp.float32, -init1, init1)
    b1 = jax.random.uniform(keys[1], (M,), jnp.float32, -init1, init1)
    w2 = jax.random.uniform(keys[2], (M, H), jnp.float32, -init2, init2)
    b2 = jax.random.uniform(keys[3], (H,), jnp.float32, -init2, init2)
    lnw = 1.0 + 0.1 * jax.random.normal(keys[4], (H,), jnp.float32)
    lnb = 0.1 * jax.random.normal(keys[5], (H,), jnp.float32)
    params = (w1, b1, w2, b2, lnw, lnb)

    input_tensor = jax.random.normal(keys[6], (B, S, H), jnp.float32)

    # TODO(synk): training-mode dropout (dropout_prob > 0) is not implemented;
    # eval-mode semantics (identity) are assumed, matching module.eval().
    out = ffnn_forward(input_tensor, params)
    out = jax.block_until_ready(out)

    ref = ffnn_reference(input_tensor, params)
    assert out.shape == (B, S, H)
    assert jnp.allclose(out, ref, atol=1e-4, rtol=1e-4), "mismatch vs reference"

    print("KERNEL_OK")
</pallas_src>

<mosaic_0001>
module attributes {stable_mosaic.version = 11 : i64} {
  func.func @ffnn_kernel(%arg0: i32, %arg1: memref<16x32xf32, #tpu.memory_space<vmem>>, %arg2: memref<32x128xf32, #tpu.memory_space<vmem>>, %arg3: memref<128x32xf32, #tpu.memory_space<vmem>>, %arg4: memref<2x128xf32, #tpu.memory_space<vmem>>, %arg5: memref<16x32xf32, #tpu.memory_space<vmem>>) attributes {dimension_semantics = [#tpu.dimension_semantics<parallel>], iteration_bounds = array<i64: 1>, scalar_prefetch = 0 : i64, scratch_operands = 0 : i64, tpu.core_type = #tpu.core_type<tc>, window_params = [{transform_indices = @transform_0, window_bounds = array<i64: 16, 32>}, {pipeline_mode = #tpu.pipeline_mode<synchronous>, transform_indices = @transform_1, window_bounds = array<i64: 32, 128>}, {pipeline_mode = #tpu.pipeline_mode<synchronous>, transform_indices = @transform_2, window_bounds = array<i64: 128, 32>}, {pipeline_mode = #tpu.pipeline_mode<synchronous>, transform_indices = @transform_3, window_bounds = array<i64: 2, 128>}, {transform_indices = @transform_4, window_bounds = array<i64: 16, 32>}]} {
    %c0 = arith.constant 0 : index
    %c0_0 = arith.constant 0 : index
    %0 = vector.load %arg1[%c0, %c0_0] : memref<16x32xf32, #tpu.memory_space<vmem>>, vector<16x32xf32>
    %c0_1 = arith.constant 0 : index
    %c0_2 = arith.constant 0 : index
    %1 = vector.load %arg4[%c0_1, %c0_2] : memref<2x128xf32, #tpu.memory_space<vmem>>, vector<2x128xf32>
    %2 = vector.extract_strided_slice %1 {offsets = [0, 0], sizes = [1, 128], strides = [1, 1]} : vector<2x128xf32> to vector<1x128xf32>
    %3 = vector.extract_strided_slice %1 {offsets = [1, 0], sizes = [1, 32], strides = [1, 1]} : vector<2x128xf32> to vector<1x32xf32>
    %4 = vector.extract_strided_slice %1 {offsets = [1, 32], sizes = [1, 32], strides = [1, 1]} : vector<2x128xf32> to vector<1x32xf32>
    %5 = vector.extract_strided_slice %1 {offsets = [1, 64], sizes = [1, 32], strides = [1, 1]} : vector<2x128xf32> to vector<1x32xf32>
    %c0_3 = arith.constant 0 : index
    %c0_4 = arith.constant 0 : index
    %6 = vector.load %arg2[%c0_3, %c0_4] : memref<32x128xf32, #tpu.memory_space<vmem>>, vector<32x128xf32>
    %cst = arith.constant dense<0.000000e+00> : vector<16x128xf32>
    %7 = tpu.matmul %0, %6, %cst {dimension_numbers = #tpu.dot_dimension_numbers<[1], [0], [0], [1], [0, 0, 1, 1], [], []>} : vector<16x32xf32>, vector<32x128xf32>, vector<16x128xf32> -> vector<16x128xf32>
    %8 = vector.broadcast %2 : vector<1x128xf32> to vector<16x128xf32>
    %9 = arith.addf %7, %8 : vector<16x128xf32>
    %cst_5 = arith.constant 5.000000e-01 : f32
    %10 = vector.broadcast %cst_5 : f32 to vector<16x128xf32>
    %11 = arith.mulf %10, %9 : vector<16x128xf32>
    %cst_6 = arith.constant 4.471500e-02 : f32
    %12 = vector.broadcast %cst_6 : f32 to vector<16x128xf32>
    %13 = arith.mulf %12, %9 : vector<16x128xf32>
    %14 = arith.mulf %13, %9 : vector<16x128xf32>
    %15 = arith.mulf %14, %9 : vector<16x128xf32>
    %16 = arith.addf %9, %15 : vector<16x128xf32>
    %cst_7 = arith.constant 0.797884583 : f32
    %17 = vector.broadcast %cst_7 : f32 to vector<16x128xf32>
    %18 = arith.mulf %17, %16 : vector<16x128xf32>
    %19 = math.tanh %18 : vector<16x128xf32>
    %cst_8 = arith.constant 1.000000e+00 : f32
    %20 = vector.broadcast %cst_8 : f32 to vector<16x128xf32>
    %21 = arith.addf %20, %19 : vector<16x128xf32>
    %22 = arith.mulf %11, %21 : vector<16x128xf32>
    %c0_9 = arith.constant 0 : index
    %c0_10 = arith.constant 0 : index
    %23 = vector.load %arg3[%c0_9, %c0_10] : memref<128x32xf32, #tpu.memory_space<vmem>>, vector<128x32xf32>
    %cst_11 = arith.constant dense<0.000000e+00> : vector<16x32xf32>
    %24 = tpu.matmul %22, %23, %cst_11 {dimension_numbers = #tpu.dot_dimension_numbers<[1], [0], [0], [1], [0, 0, 1, 1], [], []>} : vector<16x128xf32>, vector<128x32xf32>, vector<16x32xf32> -> vector<16x32xf32>
    %25 = vector.broadcast %3 : vector<1x32xf32> to vector<16x32xf32>
    %26 = arith.addf %24, %25 : vector<16x32xf32>
    %27 = arith.addf %26, %0 : vector<16x32xf32>
    %cst_12 = arith.constant dense<0.000000e+00> : vector<16xf32>
    %28 = vector.multi_reduction <add>, %27, %cst_12 [1] : vector<16x32xf32> to vector<16xf32>
    %29 = vector.shape_cast %28 : vector<16xf32> to vector<16x1xf32>
    %cst_13 = arith.constant 3.200000e+01 : f32
    %30 = vector.broadcast %cst_13 : f32 to vector<16x1xf32>
    %31 = arith.divf %29, %30 : vector<16x1xf32>
    %32 = vector.broadcast %31 : vector<16x1xf32> to vector<16x32xf32>
    %33 = arith.subf %27, %32 : vector<16x32xf32>
    %34 = arith.mulf %33, %33 : vector<16x32xf32>
    %cst_14 = arith.constant dense<0.000000e+00> : vector<16xf32>
    %35 = vector.multi_reduction <add>, %34, %cst_14 [1] : vector<16x32xf32> to vector<16xf32>
    %36 = vector.shape_cast %35 : vector<16xf32> to vector<16x1xf32>
    %cst_15 = arith.constant 3.200000e+01 : f32
    %37 = vector.broadcast %cst_15 : f32 to vector<16x1xf32>
    %38 = arith.divf %36, %37 : vector<16x1xf32>
    %cst_16 = arith.constant 9.99999996E-13 : f32
    %39 = vector.broadcast %cst_16 : f32 to vector<16x1xf32>
    %40 = arith.addf %38, %39 : vector<16x1xf32>
    %41 = math.rsqrt %40 : vector<16x1xf32>
    %42 = vector.broadcast %41 : vector<16x1xf32> to vector<16x32xf32>
    %43 = arith.mulf %33, %42 : vector<16x32xf32>
    %44 = vector.broadcast %4 : vector<1x32xf32> to vector<16x32xf32>
    %45 = arith.mulf %43, %44 : vector<16x32xf32>
    %46 = vector.broadcast %5 : vector<1x32xf32> to vector<16x32xf32>
    %47 = arith.addf %45, %46 : vector<16x32xf32>
    %c0_17 = arith.constant 0 : index
    %c0_18 = arith.constant 0 : index
    %48 = vector.load %arg5[%c0_17, %c0_18] : memref<16x32xf32, #tpu.memory_space<vmem>>, vector<16x32xf32>
    tpu.vector_store %arg5[%c0_17, %c0_18], %47 {strides = array<i32>} : memref<16x32xf32, #tpu.memory_space<vmem>>, vector<16x32xf32>,
    return
  }
  func.func @transform_0(%arg0: i32) -> (i32, i32) {
    %c0_i32 = arith.constant 0 : i32
    %c0_i32_0 = arith.constant 0 : i32
    return %arg0, %c0_i32 : i32, i32
  }
  func.func @transform_1(%arg0: i32) -> (i32, i32) {
    %c0_i32 = arith.constant 0 : i32
    %c0_i32_0 = arith.constant 0 : i32
    %c0_i32_1 = arith.constant 0 : i32
    return %c0_i32, %c0_i32_0 : i32, i32
  }
  func.func @transform_2(%arg0: i32) -> (i32, i32) {
    %c0_i32 = arith.constant 0 : i32
    %c0_i32_0 = arith.constant 0 : i32
    %c0_i32_1 = arith.constant 0 : i32
    return %c0_i32, %c0_i32_0 : i32, i32
  }
  func.func @transform_3(%arg0: i32) -> (i32, i32) {
    %c0_i32 = arith.constant 0 : i32
    %c0_i32_0 = arith.constant 0 : i32
    %c0_i32_1 = arith.constant 0 : i32
    return %c0_i32, %c0_i32_0 : i32, i32
  }
  func.func @transform_4(%arg0: i32) -> (i32, i32) {
    %c0_i32 = arith.constant 0 : i32
    %c0_i32_0 = arith.constant 0 : i32
    return %arg0, %c0_i32 : i32, i32
  }
}

</mosaic_0001>

<llo_original>
// kernel: tpu_custom_call.1
$region0: #{tpu_custom_call.1}
  #allocation0 [shape = 'u32[]', space=smem, size = 0x4, offset = 0x4, fixed_abs, tag = 'smem constant byte address 0x4 - core index']
  #allocation1 [shape = 'u32[144,128]{1,0:T(1,128)}', space=vmem, size = 0x12000, scoped, tag = 'internal scratch']
  %s0 = inlined_call_operand.vmem [shape: f32[16,32], index: 0, kind: input, shape index: {}]
  %s1 = inlined_call_operand.vmem [shape: f32[32,128], index: 1, kind: input, shape index: {}]
  %s2 = inlined_call_operand.vmem [shape: f32[128,32], index: 2, kind: input, shape index: {}]
  %s3 = inlined_call_operand.vmem [shape: f32[2,128], index: 3, kind: input, shape index: {}]
  %s4 = inlined_call_operand.hbm [shape: f32[16,32], index: 4, kind: output, shape index: {}]
  %s5 = sld [smem:[#allocation0]]
  $region26: #{tpu_custom_call.1} parent=0
    _
  %s7 = ssub.s32 1, %s5
  %s8 = scalar_select 0, %s7, %s5
  $region1: #{tpu_custom_call.1} parent=0
    #allocation2 [shape = 'u8[8192]{0}', space=vmem, size = 0x2000, scoped, tag = 'output window, operand 0, single buffered']
    #allocation3 [shape = 's32[1]{0}', space=sflag, size = 0x4, scoped, tag = 'scoped memory for tpu_custom_call.1']
    %9 = vsyncpa [#allocation3], 0
    // Predicated region
    $region2: #{tpu_custom_call.1} parent=1 // pred_check
      _
    $region3: #{tpu_custom_call.1} parent=1 // pred_check_branch
      %11 = sbr.rel (0) target = $region5
    $region4: #{tpu_custom_call.1} parent=1 // pred_region
      _
    $region5: #{tpu_custom_call.1} parent=1 // pred_fallthru
      _
    // Predicated region
    $region6: #{tpu_custom_call.1} parent=1 // pred_check
      _
    $region7: #{tpu_custom_call.1} parent=1 // pred_check_branch
      %13 = sbr.rel (0) target = $region9
    $region8: #{tpu_custom_call.1} parent=1 // pred_region
      _
    $region9: #{tpu_custom_call.1} parent=1 // pred_fallthru
      _
    // Predicated region
    $region10: #{tpu_custom_call.1} parent=1 // pred_check
      _
    $region11: #{tpu_custom_call.1} parent=1 // pred_check_branch
      %15 = sbr.rel (0) target = $region13
    $region12: #{tpu_custom_call.1} parent=1 // pred_region
      _
    $region13: #{tpu_custom_call.1} parent=1 // pred_fallthru
      _
    // Predicated region
    $region14: #{tpu_custom_call.1} parent=1 // pred_check
      _
    $region15: #{tpu_custom_call.1} parent=1 // pred_check_branch
      %17 = sbr.rel (0) target = $region17
    $region16: #{tpu_custom_call.1} parent=1 // pred_region
      _
    $region17: #{tpu_custom_call.1} parent=1 // pred_fallthru
      _
    %v18 = vld [vmem:[%s0] sm:$0xff]
    %v19 = vld [vmem:[%s0 + $0x8] sm:$0xff]
    %v20 = vld [vmem:[%s3] sm:$0x3]
    %v21 = vld [vmem:[%s1] sm:$0xff]
    %v22 = vld [vmem:[%s1 + $0x8] sm:$0xff]
    %v23 = vld [vmem:[%s1 + $0x10] sm:$0xff]
    %v24 = vld [vmem:[%s1 + $0x18] sm:$0xff]
    %v25 = vlaneseq
    %v26 = vshrl.u32 %v25, 7
    %v27 = vsub.s32 0, %v26
    %v28 = vrot.slane %v20, %v27
    %vm29 = vcmask 261120
    %v31 = vsel %vm29, %v18, 0
    %v34 = vsel %vm29, %v19, 0
    %36 = vmatprep.subr.mxu0 0.0
    %37 = vmatpush1.msra.mxu0 %v21
    %38 = vmatprep.subr.mxu0 0.0
    %39 = vmatpush1.msra.mxu0 %v22
    %40 = vmatprep.subr.mxu0 0.0
    %41 = vmatpush1.msra.mxu0 %v23
    %42 = vmatprep.subr.mxu0 0.0
    %43 = vmatpush1.msra.mxu0 %v24
    %44 = vmatprep.subr.mxu0 0.0
    %45 = vmatpush1.msra.mxu0 0.0
    %46 = vmatprep.subr.mxu0 0.0
    %47 = vmatpush1.msra.mxu0 0.0
    %48 = vmatprep.subr.mxu0 0.0
    %49 = vmatpush1.msra.mxu0 0.0
    %50 = vmatprep.subr.mxu0 0.0
    %51 = vmatpush1.msra.mxu0 0.0
    %52 = vmatprep.subr.mxu0 0.0
    %53 = vmatpush1.msra.mxu0 0.0
    %54 = vmatprep.subr.mxu0 0.0
    %55 = vmatpush1.msra.mxu0 0.0
    %56 = vmatprep.subr.mxu0 0.0
    %57 = vmatpush1.msra.mxu0 0.0
    %58 = vmatprep.subr.mxu0 0.0
    %59 = vmatpush1.msra.mxu0 0.0
    %60 = vmatprep.subr.mxu0 0.0
    %61 = vmatpush1.msra.mxu0 0.0
    %62 = vmatprep.subr.mxu0 0.0
    %63 = vmatpush1.msra.mxu0 0.0
    %64 = vmatprep.subr.mxu0 0.0
    %65 = vmatpush1.msra.mxu0 0.0
    %66 = vmatprep.subr.mxu0 0.0
    %67 = vmatpush1.msra.mxu0 0.0
    %68 = vmatprep.subr.mxu0 0.0
    %69 = vmatpush1.msra.mxu0 0.0
    %70 = vmatprep.subr.mxu0 0.0
    %71 = vmatpush1.msra.mxu0 0.0
    %72 = vmatprep.subr.mxu0 0.0
    %73 = vmatpush1.msra.mxu0 0.0
    %74 = vmatprep.subr.mxu0 0.0
    %75 = vmatpush1.msra.mxu0 0.0
    %76 = vmatprep.subr.mxu0 0.0
    %77 = vmatpush1.msra.mxu0 0.0
    %78 = vmatprep.subr.mxu0 0.0
    %79 = vmatpush1.msra.mxu0 0.0
    %80 = vmatprep.subr.mxu0 0.0
    %81 = vmatpush1.msra.mxu0 0.0
    %82 = vmatprep.subr.mxu0 0.0
    %83 = vmatpush1.msra.mxu0 0.0
    %84 = vmatprep.subr.mxu0 0.0
    %85 = vmatpush1.msra.mxu0 0.0
    %86 = vmatprep.subr.mxu0 0.0
    %87 = vmatpush1.msra.mxu0 0.0
    %88 = vmatprep.subr.mxu0 0.0
    %89 = vmatpush1.msra.mxu0 0.0
    %90 = vmatprep.subr.mxu0 0.0
    %91 = vmatpush1.msra.mxu0 0.0
    %92 = vmatprep.subr.mxu0 0.0
    %93 = vmatpush1.msra.mxu0 0.0
    %94 = vmatprep.subr.mxu0 0.0
    %95 = vmatpush1.msra.mxu0 0.0
    %96 = vmatprep.subr.mxu0 0.0
    %97 = vmatpush1.msra.mxu0 0.0
    %98 = vmatprep.subr.mxu0 0.0
    %99 = vmatpush1.msra.mxu0 0.0
    %100 = vmatprep.mubr.f32.mxu0 0.0
    %101 = vmatmul.mubr.f32.gmra.mrb[0].mxu0 %v31
    %v102 = vpop.f32.mrb[0].mxu0
    %v103 = vadd.f32 %v28, %v102
    %v104 = vpop.f32.mrb[0].mxu0
    %105 = vmatprep.mubr.f32.mxu0 0.0
    %106 = vmatmul.mubr.f32.gmra.mrb[0].mxu0 %v34
    %v107 = vpop.f32.mrb[0].mxu0
    %v108 = vadd.f32 %v28, %v107
    %v109 = vpop.f32.mrb[0].mxu0
    %110 = vdwg.mxu0
    %v111 = vmul.f32 %v103, 0.5
    %v112 = vmul.f32 %v108, 0.5
    %v113 = vmul.f32 %v103, 0.044715
    %v114 = vmul.f32 %v108, 0.044715
    %v115 = vmul.f32 %v113, %v103
    %v116 = vmul.f32 %v114, %v108
    %v117 = vmul.f32 %v115, %v103
    %v118 = vmul.f32 %v116, %v108
    %v119 = vadd.f32 %v103, %v117
    %v120 = vadd.f32 %v108, %v118
    %v121 = vmul.f32 %v119, 0.7978846
    %v122 = vmul.f32 %v120, 0.7978846
    %v123 = vtanh.pop %v121
    %v124 = vtanh.pop %v122
    %v125 = vadd.f32 %v123, 1.0
    %v126 = vadd.f32 %v124, 1.0
    %v127 = vmul.f32 %v111, %v125
    %v128 = vmul.f32 %v112, %v126
    %v129 = vld [vmem:[%s2] sm:$0xff]
    %v130 = vld [vmem:[%s2 + $0x8] sm:$0xff]
    %v131 = vld [vmem:[%s2 + $0x10] sm:$0xff]
    %v132 = vld [vmem:[%s2 + $0x18] sm:$0xff]
    %v133 = vld [vmem:[%s2 + $0x20] sm:$0xff]
    %v134 = vld [vmem:[%s2 + $0x28] sm:$0xff]
    %v135 = vld [vmem:[%s2 + $0x30] sm:$0xff]
    %v136 = vld [vmem:[%s2 + $0x38] sm:$0xff]
    %v137 = vld [vmem:[%s2 + $0x40] sm:$0xff]
    %v138 = vld [vmem:[%s2 + $0x48] sm:$0xff]
    %v139 = vld [vmem:[%s2 + $0x50] sm:$0xff]
    %v140 = vld [vmem:[%s2 + $0x58] sm:$0xff]
    %v141 = vld [vmem:[%s2 + $0x60] sm:$0xff]
    %v142 = vld [vmem:[%s2 + $0x68] sm:$0xff]
    %v143 = vld [vmem:[%s2 + $0x70] sm:$0xff]
    %v144 = vld [vmem:[%s2 + $0x78] sm:$0xff]
    %v145 = vlaneseq
    %v146 = vshrl.u32 %v145, 7
    %v147 = vsub.s32 1, %v146
    %v148 = vrot.slane %v20, %v147
    %149 = vmatprep.subr.mxu0 0.0
    %150 = vmatpush1.msra.mxu0 %v129
    %151 = vmatprep.subr.mxu0 0.0
    %152 = vmatpush1.msra.mxu0 %v130
    %153 = vmatprep.subr.mxu0 0.0
    %154 = vmatpush1.msra.mxu0 %v131
    %155 = vmatprep.subr.mxu0 0.0
    %156 = vmatpush1.msra.mxu0 %v132
    %157 = vmatprep.subr.mxu0 0.0
    %158 = vmatpush1.msra.mxu0 %v133
    %159 = vmatprep.subr.mxu0 0.0
    %160 = vmatpush1.msra.mxu0 %v134
    %161 = vmatprep.subr.mxu0 0.0
    %162 = vmatpush1.msra.mxu0 %v135
    %163 = vmatprep.subr.mxu0 0.0
    %164 = vmatpush1.msra.mxu0 %v136
    %165 = vmatprep.subr.mxu0 0.0
    %166 = vmatpush1.msra.mxu0 %v137
    %167 = vmatprep.subr.mxu0 0.0
    %168 = vmatpush1.msra.mxu0 %v138
    %169 = vmatprep.subr.mxu0 0.0
    %170 = vmatpush1.msra.mxu0 %v139
    %171 = vmatprep.subr.mxu0 0.0
    %172 = vmatpush1.msra.mxu0 %v140
    %173 = vmatprep.subr.mxu0 0.0
    %174 = vmatpush1.msra.mxu0 %v141
    %175 = vmatprep.subr.mxu0 0.0
    %176 = vmatpush1.msra.mxu0 %v142
    %177 = vmatprep.subr.mxu0 0.0
    %178 = vmatpush1.msra.mxu0 %v143
    %179 = vmatprep.subr.mxu0 0.0
    %180 = vmatpush1.msra.mxu0 %v144
    %181 = vmatprep.subr.mxu0 0.0
    %182 = vmatpush1.msra.mxu0 0.0
    %183 = vmatprep.subr.mxu0 0.0
    %184 = vmatpush1.msra.mxu0 0.0
    %185 = vmatprep.subr.mxu0 0.0
    %186 = vmatpush1.msra.mxu0 0.0
    %187 = vmatprep.subr.mxu0 0.0
    %188 = vmatpush1.msra.mxu0 0.0
    %189 = vmatprep.subr.mxu0 0.0
    %190 = vmatpush1.msra.mxu0 0.0
    %191 = vmatprep.subr.mxu0 0.0
    %192 = vmatpush1.msra.mxu0 0.0
    %193 = vmatprep.subr.mxu0 0.0
    %194 = vmatpush1.msra.mxu0 0.0
    %195 = vmatprep.subr.mxu0 0.0
    %196 = vmatpush1.msra.mxu0 0.0
    %197 = vmatprep.subr.mxu0 0.0
    %198 = vmatpush1.msra.mxu0 0.0
    %199 = vmatprep.subr.mxu0 0.0
    %200 = vmatpush1.msra.mxu0 0.0
    %201 = vmatprep.subr.mxu0 0.0
    %202 = vmatpush1.msra.mxu0 0.0
    %203 = vmatprep.subr.mxu0 0.0
    %204 = vmatpush1.msra.mxu0 0.0
    %205 = vmatprep.subr.mxu0 0.0
    %206 = vmatpush1.msra.mxu0 0.0
    %207 = vmatprep.subr.mxu0 0.0
    %208 = vmatpush1.msra.mxu0 0.0
    %209 = vmatprep.subr.mxu0 0.0
    %210 = vmatpush1.msra.mxu0 0.0
    %211 = vmatprep.subr.mxu0 0.0
    %212 = vmatpush1.msra.mxu0 0.0
    %213 = vmatprep.mubr.f32.mxu0 0.0
    %214 = vmatmul.mubr.f32.gmra.mrb[0].mxu0 %v127
    %v215 = vpop.f32.mrb[0].mxu0
    %v216 = vadd.f32 %v148, %v215
    %v217 = vpop.f32.mrb[0].mxu0
    %218 = vmatprep.mubr.f32.mxu0 0.0
    %219 = vmatmul.mubr.f32.gmra.mrb[0].mxu0 %v128
    %v220 = vpop.f32.mrb[0].mxu0
    %v221 = vadd.f32 %v148, %v220
    %v222 = vpop.f32.mrb[0].mxu0
    %223 = vdwg.mxu0
    %v224 = vadd.f32 %v216, %v18
    %v225 = vadd.f32 %v221, %v19
    %v226 = vsel %vm29, %v224, 0.0
    %227 = vadd.xlane.f32.xlu0 %v226
    %v228 = vpop.xlane.xlu0 %227
    %v229 = vsel %vm29, %v225, 0.0
    %230 = vadd.xlane.f32.xlu0 %v229
    %v231 = vpop.xlane.xlu0 %230
    %v232 = vrcp.pop 32.0
    %v233 = vmul.f32 %v228, %v232
    %v234 = vmul.f32 %v231, %v232
    %v235 = vsub.f32 %v224, %v233
    %v236 = vsub.f32 %v225, %v234
    %v237 = vmul.f32 %v235, %v235
    %v238 = vmul.f32 %v236, %v236
    %v239 = vsel %vm29, %v237, 0.0
    %240 = vadd.xlane.f32.xlu0 %v239
    %v241 = vpop.xlane.xlu0 %240
    %v242 = vsel %vm29, %v238, 0.0
    %243 = vadd.xlane.f32.xlu0 %v242
    %v244 = vpop.xlane.xlu0 %243
    %v245 = vmul.f32 %v241, %v232
    %v246 = vmul.f32 %v244, %v232
    %v247 = vadd.f32 %v245, 1e-12
    %v248 = vadd.f32 %v246, 1e-12
    %v249 = vrsqrt.pop %v247
    %v250 = vrsqrt.pop %v248
    %v251 = vmul.f32 %v235, %v249
    %v252 = vmul.f32 %v236, %v250
    %254 = vrot.lane.b32.xlu0 %v148, 96
    %v255 = vpop.permute.xlu0 %254
    %v257 = vmul.f32 %v251, %v255
    %v258 = vmul.f32 %v252, %v255
    %259 = vrot.lane.b32.xlu0 %v148, 64
    %v260 = vpop.permute.xlu0 %259
    %v262 = vadd.f32 %v257, %v260
    %v263 = vadd.f32 %v258, %v260
    %264 = vst.msk [vmem:[#allocation2] sm:$0xff] %vm29, %v262
    %265 = vst.msk [vmem:[#allocation2 + $0x8] sm:$0xff] %vm29, %v263
    // Predicated region
    $region18: #{tpu_custom_call.1} parent=1 // pred_check
      _
    $region19: #{tpu_custom_call.1} parent=1 // pred_check_branch
      %267 = sbr.rel (0) target = $region21
    $region20: #{tpu_custom_call.1} parent=1 // pred_region
      %s269 = ssub.s32 256, 256
      %270 = vsyncadd [#allocation3], %s269
      %s271 = sshll.u32 [#allocation2], 4
      %s272 = int_to_ptr.vmem [resolvable:$true] %s271
      %277 = dma.vmem_to_hbm [thread:$0]  %s272, 256, %s4, [#allocation3], 128, 128, 8
    $region21: #{tpu_custom_call.1} parent=1 // pred_fallthru
      _
    // Predicated region
    $region22: #{tpu_custom_call.1} parent=1 // pred_check
      _
    $region23: #{tpu_custom_call.1} parent=1 // pred_check_branch
      %279 = sbr.rel (0) target = $region25
    $region24: #{tpu_custom_call.1} parent=1 // pred_region
      %280 = dma.done [#allocation3], 256
    $region25: #{tpu_custom_call.1} parent=1 // pred_fallthru
      _
    %281 = vsyncpa [#allocation3], 1

</llo_original>
